<compile_context>
chip_gen: v5e
topology: v5e:2x2
jax: 0.10.0
libtpu: 0.0.40
codegen_flags: <defaults>
</compile_context>

<pallas_src>
import jax
import jax.numpy as jnp
from jax.experimental import pallas as pl
from jax.experimental.pallas import tpu as pltpu


def _convt_kernel(x_ref, w_ref, b_ref, o_ref):
    # x_ref: (1, Cin, ts)          spatial tile, lane axis = spatial
    # w_ref: (Cout*f*f, Cin)       VMEM-resident tiny weight
    # b_ref: (Cout*f*f, 1)         per-row bias (broadcast across lanes)
    # o_ref: (1, Cout*f*f, ts)     lane-dense output tile
    x = x_ref[0]                                           # (Cin, ts)
    acc = jnp.dot(w_ref[...], x, preferred_element_type=jnp.float32)
    o_ref[0] = (acc + b_ref[...]).astype(o_ref.dtype)


def _pick_spatial_tile(hw, cin, coutff, vmem_budget_bytes=10 << 20):
    """Largest lane-friendly spatial tile that fits the VMEM budget.

    Budget accounts for the double-buffered input (Cin rows) and output
    (Cout*f*f rows) columns in f32.  Prefers an exact divisor of H*W so every
    tile is full; otherwise returns the cap and lets a cdiv grid absorb the
    ragged tail.
    """
    bytes_per_col = 4 * 2 * (cin + coutff)          # f32, x2 for double-buffer
    cap = max(128, (vmem_budget_bytes // bytes_per_col) // 128 * 128)
    if hw <= cap:
        return hw
    t = cap
    while t >= 128:
        if hw % t == 0:
            return t
        t -= 128
    return cap                                       # ragged tail via cdiv grid


def up_expanded_message_pallas(x_nchw, weight, bias, flag):
    """ConvTranspose2d(Cin, Cin, kernel_size=flag, stride=flag) forward.

    x_nchw : (N, Cin, H, W) float32
    weight : (Cin, Cout, flag, flag) float32   (PyTorch ConvTranspose2d layout)
    bias   : (Cout,) float32
    returns: (N, Cout, H*flag, W*flag) float32
    """
    N, Cin, H, W = x_nchw.shape
    Cin_w, Cout, kH, kW = weight.shape
    assert Cin_w == Cin and kH == flag and kW == flag

    HW = H * W
    Coutff = Cout * kH * kW

    # Free (contiguous) reshape: native NCHW, Cin = contraction, spatial = lanes.
    x3 = x_nchw.reshape(N, Cin, HW)
    # Tiny (Cout*f*f, Cin) transposed weight; rows flattened as (co, kh, kw).
    wt = jnp.transpose(weight.reshape(Cin, Coutff), (1, 0))
    # Bias matches the (co, kh, kw) row flattening; column vector for lane-bcast.
    b2 = jnp.repeat(bias, kH * kW).reshape(Coutff, 1)

    ts = _pick_spatial_tile(HW, Cin, Coutff)
    grid = (N, pl.cdiv(HW, ts))

    flops = 2 * N * Coutff * Cin * HW + N * Coutff * HW
    bytes_accessed = 4 * (N * Cin * HW + Coutff * Cin + Coutff + N * Coutff * HW)

    out3 = pl.pallas_call(
        _convt_kernel,
        out_shape=jax.ShapeDtypeStruct((N, Coutff, HW), x_nchw.dtype),
        grid_spec=pltpu.PrefetchScalarGridSpec(
            num_scalar_prefetch=0,
            grid=grid,
            in_specs=[
                pl.BlockSpec((1, Cin, ts), lambda n, s: (n, 0, s)),
                pl.BlockSpec((Coutff, Cin), lambda n, s: (0, 0)),
                pl.BlockSpec((Coutff, 1), lambda n, s: (0, 0)),
            ],
            out_specs=pl.BlockSpec((1, Coutff, ts), lambda n, s: (n, 0, s)),
        ),
        compiler_params=pltpu.CompilerParams(
            dimension_semantics=("parallel", "parallel"),
        ),
        cost_estimate=pl.CostEstimate(
            flops=flops, transcendentals=0, bytes_accessed=bytes_accessed),
    )(x3, wt, b2)

    # Scatter the (f x f) blocks back into NCHW spatial layout (wrapper-side).
    out = out3.reshape(N, Cout, kH, kW, H, W)
    out = jnp.transpose(out, (0, 1, 4, 2, 5, 3))   # (N, Cout, H, kH, W, kW)
    out = out.reshape(N, Cout, H * kH, W * kW)
    return out


if __name__ == "__main__":
    # Small shapes consistent with the module: inchannels=4, flag=2
    N, Cin, H, W = 2, 4, 16, 16
    flag = 2
    Cout = Cin

    key = jax.random.PRNGKey(0)
    kx, kw, kb = jax.random.split(key, 3)
    x = jax.random.normal(kx, (N, Cin, H, W), dtype=jnp.float32)
    weight = jax.random.normal(kw, (Cin, Cout, flag, flag), dtype=jnp.float32) * 0.1
    bias = jax.random.normal(kb, (Cout,), dtype=jnp.float32) * 0.1

    out = up_expanded_message_pallas(x, weight, bias, flag)
    out = jax.block_until_ready(out)

    # pure-JAX reference for the non-overlapping transposed conv
    ref = jnp.einsum("nchw,cdij->ndhiwj", x, weight)
    ref = ref.reshape(N, Cout, H * flag, W * flag) + bias[None, :, None, None]

    assert out.shape == (N, Cout, H * flag, W * flag)
    assert jnp.allclose(out, ref, atol=1e-5, rtol=1e-5)

    print("KERNEL_OK")
</pallas_src>

<mosaic_0001>
module attributes {stable_mosaic.version = 11 : i64} {
  func.func @_convt_kernel(%arg0: i32, %arg1: i32, %arg2: memref<1x4x256xf32, #tpu.memory_space<vmem>>, %arg3: memref<16x4xf32, #tpu.memory_space<vmem>>, %arg4: memref<16x1xf32, #tpu.memory_space<vmem>>, %arg5: memref<1x16x256xf32, #tpu.memory_space<vmem>>) attributes {dimension_semantics = [#tpu.dimension_semantics<parallel>, #tpu.dimension_semantics<parallel>], iteration_bounds = array<i64: 2, 1>, scalar_prefetch = 0 : i64, scratch_operands = 0 : i64, tpu.core_type = #tpu.core_type<tc>, window_params = [{transform_indices = @transform_0, window_bounds = array<i64: 1, 4, 256>}, {pipeline_mode = #tpu.pipeline_mode<synchronous>, transform_indices = @transform_1, window_bounds = array<i64: 16, 4>}, {pipeline_mode = #tpu.pipeline_mode<synchronous>, transform_indices = @transform_2, window_bounds = array<i64: 16, 1>}, {transform_indices = @transform_3, window_bounds = array<i64: 1, 16, 256>}]} {
    %c0 = arith.constant 0 : index
    %c0_0 = arith.constant 0 : index
    %c0_1 = arith.constant 0 : index
    %0 = vector.load %arg2[%c0, %c0_0, %c0_1] : memref<1x4x256xf32, #tpu.memory_space<vmem>>, vector<1x4x256xf32>
    %1 = vector.shape_cast %0 : vector<1x4x256xf32> to vector<4x256xf32>
    %c0_2 = arith.constant 0 : index
    %c0_3 = arith.constant 0 : index
    %2 = vector.load %arg3[%c0_2, %c0_3] : memref<16x4xf32, #tpu.memory_space<vmem>>, vector<16x4xf32>
    %cst = arith.constant dense<0.000000e+00> : vector<16x256xf32>
    %3 = tpu.matmul %2, %1, %cst {dimension_numbers = #tpu.dot_dimension_numbers<[1], [0], [0], [1], [0, 0, 1, 1], [], []>} : vector<16x4xf32>, vector<4x256xf32>, vector<16x256xf32> -> vector<16x256xf32>
    %c0_4 = arith.constant 0 : index
    %c0_5 = arith.constant 0 : index
    %4 = vector.load %arg4[%c0_4, %c0_5] : memref<16x1xf32, #tpu.memory_space<vmem>>, vector<16x1xf32>
    %5 = vector.broadcast %4 : vector<16x1xf32> to vector<16x256xf32>
    %6 = arith.addf %3, %5 : vector<16x256xf32>
    %c0_6 = arith.constant 0 : index
    %c0_7 = arith.constant 0 : index
    %c0_8 = arith.constant 0 : index
    %7 = vector.load %arg5[%c0_6, %c0_7, %c0_8] : memref<1x16x256xf32, #tpu.memory_space<vmem>>, vector<1x16x256xf32>
    %8 = vector.shape_cast %7 : vector<1x16x256xf32> to vector<16x256xf32>
    %9 = vector.shape_cast %6 : vector<16x256xf32> to vector<1x16x256xf32>
    tpu.vector_store %arg5[%c0_6, %c0_7, %c0_8], %9 {strides = array<i32>} : memref<1x16x256xf32, #tpu.memory_space<vmem>>, vector<1x16x256xf32>,
    return
  }
  func.func @transform_0(%arg0: i32, %arg1: i32) -> (i32, i32, i32) {
    %c0_i32 = arith.constant 0 : i32
    %c0_i32_0 = arith.constant 0 : i32
    return %arg0, %c0_i32, %arg1 : i32, i32, i32
  }
  func.func @transform_1(%arg0: i32, %arg1: i32) -> (i32, i32) {
    %c0_i32 = arith.constant 0 : i32
    %c0_i32_0 = arith.constant 0 : i32
    %c0_i32_1 = arith.constant 0 : i32
    return %c0_i32, %c0_i32_0 : i32, i32
  }
  func.func @transform_2(%arg0: i32, %arg1: i32) -> (i32, i32) {
    %c0_i32 = arith.constant 0 : i32
    %c0_i32_0 = arith.constant 0 : i32
    %c0_i32_1 = arith.constant 0 : i32
    return %c0_i32, %c0_i32_0 : i32, i32
  }
  func.func @transform_3(%arg0: i32, %arg1: i32) -> (i32, i32, i32) {
    %c0_i32 = arith.constant 0 : i32
    %c0_i32_0 = arith.constant 0 : i32
    return %arg0, %c0_i32, %arg1 : i32, i32, i32
  }
}

</mosaic_0001>

<llo_original>
// kernel: tpu_custom_call.1
$region0: #{tpu_custom_call.1}
  #allocation0 [shape = 'u32[]', space=smem, size = 0x4, offset = 0x4, fixed_abs, tag = 'smem constant byte address 0x4 - core index']
  #allocation1 [shape = 'u32[72,128]{1,0:T(1,128)}', space=vmem, size = 0x9000, scoped, tag = 'internal scratch']
  %s0 = inlined_call_operand.vmem [shape: f32[2,4,256], index: 0, kind: input, shape index: {}]
  %s1 = inlined_call_operand.vmem [shape: f32[16,4], index: 1, kind: input, shape index: {}]
  %s2 = inlined_call_operand.vmem [shape: f32[16,1], index: 2, kind: input, shape index: {}]
  %s3 = inlined_call_operand.hbm [shape: f32[2,16,256], index: 3, kind: output, shape index: {}]
  %s4 = sld [smem:[#allocation0]]
  $region45: #{tpu_custom_call.1} parent=0
    _
  %s6 = ssub.s32 1, %s4
  %s7 = scalar_select 0, %s6, %s4
  $region1: #{tpu_custom_call.1} parent=0
    #allocation2 [shape = 'u8[32768]{0}', space=vmem, size = 0x8000, scoped, tag = 'output window, operand 0']
    #allocation3 [shape = 's32[2]{0}', space=sflag, size = 0x8, scoped, tag = 'scoped memory for tpu_custom_call.1']
    %8 = vsyncpa [#allocation3], 0
    %s9 = scalar_lea.sflag [#allocation3], 1
    %10 = vsyncpa %s9, 0
    loop: start=0, step=1, limit=4
    $region2: #{tpu_custom_call.1} parent=1 // loop_pre_header
      _
    $region3: #{tpu_custom_call.1} parent=1 // loop_header
      %s12 = sphi 0, %s16
      %p13 = scmp.ge.s32.totalorder %s12, 4
      %s19 = sphi 0, %s31
      %s20 = sphi 0, %s27
      %s21 = sphi 0, %s19
      %s22 = sphi 0, %s20
      %s23 = sphi 0, %s21
      %s24 = sphi 0, %s22
      %s36 = sphi 0, %s38
      %s39 = sphi 0, %s36
      %s40 = sphi 0, %s39
      %s56 = sphi 0, %s40
      %s60 = sphi 0, %s60
      %s62 = sphi 0, %s60
      %s63 = sphi 0, %s62
      %s77 = sphi 0, %s63
      %s81 = sphi 0, %s81
      %s83 = sphi 0, %s81
      %s84 = sphi 0, %s83
      %s98 = sphi 0, %s84
      %s106 = sphi 0, %s108
      %s109 = sphi 0, %s106
      %s110 = sphi 0, %s109
      %s126 = sphi 0, %s110
    $region4: #{tpu_custom_call.1} parent=1 // loop_header_branch
      %15 = sbr.rel (%p13) target = $region8
    $region5: #{tpu_custom_call.1} parent=1 // loop_body
      %s17 = ssub.s32 %s12, 1
      %s18 = ssub.s32 %s12, 2
      %s25 = sadd.s32 1, %s20
      %p26 = scmp.ge.s32.totalorder %s25, 1
      %s27 = scalar_select %p26, 0, %s25
      %s28 = sadd.s32 1, %s19
      %s29 = scalar_select %p26, %s28, %s19
      %p30 = scmp.ge.s32.totalorder %s29, 2
      %s31 = scalar_select %p30, 0, %s29
      %s32 = ssub.s32 %s19, %s31
      %s33 = ssub.s32 %s20, %s27
      %s34 = sor.u32 %s32, %s33
      %p35 = scmp.eq.s32.totalorder %s34, 0
      %s37 = sadd.s32 %s36, 1
      %s38 = scalar_select %p35, %s36, %s37
      %p41 = pneg %p35
      %p42 = scmp.eq.s32.totalorder %s12, 1
      %p43 = por %p41, %p42
      %p44 = scmp.ne.s32.totalorder %s36, %s39
      %p45 = scmp.eq.s32.totalorder %s12, 0
      %p46 = por %p44, %p45
      %p47 = scmp.ne.s32.totalorder %s36, %s39
      %p48 = scmp.eq.s32.totalorder %s17, 1
      %p49 = por %p47, %p48
      %p50 = scmp.ne.s32.totalorder %s39, %s40
      %p51 = scmp.eq.s32.totalorder %s17, 0
      %p52 = por %p50, %p51
      %p53 = scmp.ne.s32.totalorder %s39, %s40
      %p54 = scmp.eq.s32.totalorder %s18, 1
      %p55 = por %p53, %p54
      %p57 = scmp.ne.s32.totalorder %s40, %s56
      %p58 = scmp.eq.s32.totalorder %s18, 0
      %p59 = por %p57, %p58
      %s61 = sadd.s32 %s60, 1
      %p64 = scmp.eq.s32.totalorder %s12, 1
      %p65 = scmp.ne.s32.totalorder %s60, %s62
      %p66 = scmp.eq.s32.totalorder %s12, 0
      %p67 = por %p65, %p66
      %p68 = scmp.ne.s32.totalorder %s60, %s62
      %p69 = scmp.eq.s32.totalorder %s17, 1
      %p70 = por %p68, %p69
      %p71 = scmp.ne.s32.totalorder %s62, %s63
      %p72 = scmp.eq.s32.totalorder %s17, 0
      %p73 = por %p71, %p72
      %p74 = scmp.ne.s32.totalorder %s62, %s63
      %p75 = scmp.eq.s32.totalorder %s18, 1
      %p76 = por %p74, %p75
      %p78 = scmp.ne.s32.totalorder %s63, %s77
      %p79 = scmp.eq.s32.totalorder %s18, 0
      %p80 = por %p78, %p79
      %s82 = sadd.s32 %s81, 1
      %p85 = scmp.eq.s32.totalorder %s12, 1
      %p86 = scmp.ne.s32.totalorder %s81, %s83
      %p87 = scmp.eq.s32.totalorder %s12, 0
      %p88 = por %p86, %p87
      %p89 = scmp.ne.s32.totalorder %s81, %s83
      %p90 = scmp.eq.s32.totalorder %s17, 1
      %p91 = por %p89, %p90
      %p92 = scmp.ne.s32.totalorder %s83, %s84
      %p93 = scmp.eq.s32.totalorder %s17, 0
      %p94 = por %p92, %p93
      %p95 = scmp.ne.s32.totalorder %s83, %s84
      %p96 = scmp.eq.s32.totalorder %s18, 1
      %p97 = por %p95, %p96
      %p99 = scmp.ne.s32.totalorder %s84, %s98
      %p100 = scmp.eq.s32.totalorder %s18, 0
      %p101 = por %p99, %p100
      %s102 = ssub.s32 %s19, %s31
      %s103 = ssub.s32 %s20, %s27
      %s104 = sor.u32 %s102, %s103
      %p105 = scmp.eq.s32.totalorder %s104, 0
      %s107 = sadd.s32 %s106, 1
      %s108 = scalar_select %p105, %s106, %s107
      %p111 = pneg %p105
      %p112 = scmp.eq.s32.totalorder %s12, 1
      %p113 = por %p111, %p112
      %p114 = scmp.ne.s32.totalorder %s106, %s109
      %p115 = scmp.eq.s32.totalorder %s12, 0
      %p116 = por %p114, %p115
      %p117 = scmp.ne.s32.totalorder %s106, %s109
      %p118 = scmp.eq.s32.totalorder %s17, 1
      %p119 = por %p117, %p118
      %p120 = scmp.ne.s32.totalorder %s109, %s110
      %p121 = scmp.eq.s32.totalorder %s17, 0
      %p122 = por %p120, %p121
      %p123 = scmp.ne.s32.totalorder %s109, %s110
      %p124 = scmp.eq.s32.totalorder %s18, 1
      %p125 = por %p123, %p124
      %p127 = scmp.ne.s32.totalorder %s110, %s126
      %p128 = scmp.eq.s32.totalorder %s18, 0
      %p129 = por %p127, %p128
      %p130 = scmp.le.s32.totalorder 1, %s12
      %p131 = scmp.lt.s32.totalorder %s12, 3
      %p132 = pnand %p130, %p131
      %p133 = pneg %p132
      // Predicated region
      $region9: #{tpu_custom_call.1} parent=5 // pred_check
        _
      $region10: #{tpu_custom_call.1} parent=5 // pred_check_branch
        %135 = sbr.rel (%p132) target = $region12
      $region11: #{tpu_custom_call.1} parent=5 // pred_region
        %s136 = ssub.s32 %s12, 1
        // Predicated region
        $region13: #{tpu_custom_call.1} parent=11 // pred_check
          %p137 = pneg %p73
        $region14: #{tpu_custom_call.1} parent=11 // pred_check_branch
          %139 = sbr.rel (%p137) target = $region16
        $region15: #{tpu_custom_call.1} parent=11 // pred_region
          _
        $region16: #{tpu_custom_call.1} parent=11 // pred_fallthru
          _
        // Predicated region
        $region17: #{tpu_custom_call.1} parent=11 // pred_check
          %p140 = pneg %p94
        $region18: #{tpu_custom_call.1} parent=11 // pred_check_branch
          %142 = sbr.rel (%p140) target = $region20
        $region19: #{tpu_custom_call.1} parent=11 // pred_region
          _
        $region20: #{tpu_custom_call.1} parent=11 // pred_fallthru
          _
      $region12: #{tpu_custom_call.1} parent=5 // pred_fallthru
        _
      %p143 = scmp.lt.s32.totalorder %s12, 2
      // Predicated region
      $region21: #{tpu_custom_call.1} parent=5 // pred_check
        %p144 = pneg %p143
      $region22: #{tpu_custom_call.1} parent=5 // pred_check_branch
        %146 = sbr.rel (%p144) target = $region24
      $region23: #{tpu_custom_call.1} parent=5 // pred_region
        // Predicated region
        $region25: #{tpu_custom_call.1} parent=23 // pred_check
          %p147 = pneg %p46
        $region26: #{tpu_custom_call.1} parent=23 // pred_check_branch
          %149 = sbr.rel (%p147) target = $region28
        $region27: #{tpu_custom_call.1} parent=23 // pred_region
          %s150 = smul.u32 2, %s20
          %p151 = scmp.lt.s32.totalorder %s19, 1
          %s152 = scalar_select %p151, %s19, 1
          %p153 = scmp.lt.s32.totalorder %s150, 1
          %s154 = scalar_select %p153, %s150, 1
          %s155 = smul.addr %s152, 2
          %s156 = sadd.s32 %s154, %s155
          %s157 = smul.addr %s156, 4
          %s158 = scalar_lea.vmem %s0, %s157
          %s159 = smul.u32 2, %s20
        $region28: #{tpu_custom_call.1} parent=23 // pred_fallthru
          _
      $region24: #{tpu_custom_call.1} parent=5 // pred_fallthru
        _
      %p160 = scmp.le.s32.totalorder 1, %s12
      %p161 = scmp.lt.s32.totalorder %s12, 3
      %p162 = pnand %p160, %p161
      %p163 = pneg %p162
      // Predicated region
      $region29: #{tpu_custom_call.1} parent=5 // pred_check
        _
      $region30: #{tpu_custom_call.1} parent=5 // pred_check_branch
        %165 = sbr.rel (%p162) target = $region32
      $region31: #{tpu_custom_call.1} parent=5 // pred_region
        %s166 = ssub.s32 %s12, 1
        %s167 = smul.u32 2, %s22
        %p168 = scmp.lt.s32.totalorder %s21, 1
        %s169 = scalar_select %p168, %s21, 1
        %p170 = scmp.lt.s32.totalorder %s167, 1
        %s171 = scalar_select %p170, %s167, 1
        %s172 = smul.addr %s169, 2
        %s173 = sadd.s32 %s171, %s172
        %s174 = smul.addr %s173, 4
        %s175 = scalar_lea.vmem %s0, %s174
        %p176 = pneg %p52
        %p177 = pneg %p49
        %p178 = pneg %p73
        %p179 = pneg %p70
        %p180 = pneg %p94
        %p181 = pneg %p91
        %p182 = pneg %p122
        %p183 = pneg %p119
        %s184 = sand.u32 %s109, 1
        %s185 = scalar_lea.sflag [#allocation3], %s184
        %s186 = sand.u32 %s109, 1
        %s187 = smul.addr %s186, 32
        %s188 = scalar_lea.vmem [#allocation2], %s187
        %s189 = smul.u32 2, %s22
        %p190 = scmp.lt.s32.totalorder %s21, 1
        %s191 = scalar_select %p190, %s21, 1
        %p192 = scmp.lt.s32.totalorder %s189, 1
        %s193 = scalar_select %p192, %s189, 1
        %s194 = smul.addr %s191, 2
        %s195 = sadd.s32 %s193, %s194
        %s196 = smul.addr %s195, 4
        %s197 = scalar_lea.vmem %s0, %s196
        %s198 = smul.u32 2, %s22
        %s199 = smul.u32 2, %s22
        %v200 = vld [vmem:[%s197] sm:$0xff]
        %v201 = vld [vmem:[%s1] sm:$0xff]
        %v202 = vld [vmem:[%s1 + $0x8] sm:$0xff]
        %v203 = vld [vmem:[%s2] sm:$0xff]
        %v204 = vld [vmem:[%s2 + $0x8] sm:$0xff]
        %206 = vset.pattern.permute.xlu0 0
        %207 = vperm.xlu0 %206, %v203
        %v208 = vpop.permute.xlu0 %207
        %211 = vset.pattern.permute.xlu0 0
        %212 = vperm.xlu0 %211, %v204
        %v213 = vpop.permute.xlu0 %212
        %216 = vst [vmem:[#allocation1] ss:$2 sm:$0xff] %v200
        %v217 = vld.sshfl [vmem:[#allocation1] sm:$0xff pattern:$0x75316420]
        %v218 = vld.sshfl [vmem:[#allocation1 + $0x8] sm:$0xff pattern:$0x75316420]
        %vm219 = vcmask 31744
        %v221 = vsel %vm219, %v201, 0
        %v224 = vsel %vm219, %v202, 0
        %vm226 = vcmask 1043456
        %v227 = vsel %vm226, %v217, 0
        %v229 = vsel %vm226, %v218, 0
        %231 = vmatpush.msra.mxu0 0.0
        %232 = vmatpush.msra.mxu0 0.0
        %233 = vmatpush.msra.mxu0 0.0
        %234 = vmatpush.msra.mxu0 0.0
        %235 = vmatpush.msra.mxu0 0.0
        %236 = vmatpush.msra.mxu0 0.0
        %237 = vmatpush.msra.mxu0 0.0
        %238 = vmatpush.msra.mxu0 0.0
        %239 = vmatpush.msra.mxu0 0.0
        %240 = vmatpush.msra.mxu0 0.0
        %241 = vmatpush.msra.mxu0 0.0
        %242 = vmatpush.msra.mxu0 0.0
        %243 = vmatpush.msra.mxu0 0.0
        %244 = vmatpush.msra.mxu0 0.0
        %245 = vmatpush.msra.mxu0 0.0
        %246 = vmatpush.msra.mxu0 %v227
        %247 = vmatmul.f32.gmra.mxu0 %v221
        %v248 = vpop.f32.mrf.mxu0
        %v249 = vadd.f32 %v208, %v248
        %250 = vmatmul.f32.gmra.mxu0 %v224
        %v251 = vpop.f32.mrf.mxu0
        %v252 = vadd.f32 %v213, %v251
        %253 = vdwg.mxu0
        %254 = vmatpush.msra.mxu0 0.0
        %255 = vmatpush.msra.mxu0 0.0
        %256 = vmatpush.msra.mxu0 0.0
        %257 = vmatpush.msra.mxu0 0.0
        %258 = vmatpush.msra.mxu0 0.0
        %259 = vmatpush.msra.mxu0 0.0
        %260 = vmatpush.msra.mxu0 0.0
        %261 = vmatpush.msra.mxu0 0.0
        %262 = vmatpush.msra.mxu0 0.0
        %263 = vmatpush.msra.mxu0 0.0
        %264 = vmatpush.msra.mxu0 0.0
        %265 = vmatpush.msra.mxu0 0.0
        %266 = vmatpush.msra.mxu0 0.0
        %267 = vmatpush.msra.mxu0 0.0
        %268 = vmatpush.msra.mxu0 0.0
        %269 = vmatpush.msra.mxu0 %v229
        %270 = vmatmul.f32.gmra.mxu0 %v221
        %v271 = vpop.f32.mrf.mxu0
        %v272 = vadd.f32 %v208, %v271
        %273 = vmatmul.f32.gmra.mxu0 %v224
        %v274 = vpop.f32.mrf.mxu0
        %v275 = vadd.f32 %v213, %v274
        %276 = vdwg.mxu0
        %277 = vst [vmem:[%s188] sm:$0xff] %v249
        %278 = vst [vmem:[%s188 + $0x8] sm:$0xff] %v272
        %279 = vst [vmem:[%s188 + $0x10] sm:$0xff] %v252
        %280 = vst [vmem:[%s188 + $0x18] sm:$0xff] %v275
        %s281 = sand.u32 %s109, 1
        %s282 = scalar_lea.sflag [#allocation3], %s281
        %s283 = sand.u32 %s109, 1
        %s284 = smul.addr %s283, 32
        %s285 = scalar_lea.vmem [#allocation2], %s284
        // Predicated region
        $region33: #{tpu_custom_call.1} parent=31 // pred_check
          %p286 = pneg %p119
        $region34: #{tpu_custom_call.1} parent=31 // pred_check_branch
          %288 = sbr.rel (%p286) target = $region36
        $region35: #{tpu_custom_call.1} parent=31 // pred_region
          %s289 = smul.u32 2, %s22
          %291 = vsyncadd %s282, 0
          %s292 = smul.addr %s21, 4
          %s293 = sadd.s32 %s289, %s292
          %s294 = smul.addr %s293, 8
          %s295 = scalar_lea.hbm %s3, %s294
          %s296 = sshll.u32 %s285, 4
          %s297 = int_to_ptr.vmem [resolvable:$true] %s296
          %s298 = sshll.u32 %s295, 4
          %s299 = int_to_ptr.hbm [resolvable:$true] %s298
          %304 = dma.vmem_to_hbm [thread:$0]  %s297, 512, %s299, %s282, 256, 256, 16
        $region36: #{tpu_custom_call.1} parent=31 // pred_fallthru
          _
      $region32: #{tpu_custom_call.1} parent=5 // pred_fallthru
        _
      %p305 = scmp.le.s32.totalorder 2, %s12
      // Predicated region
      $region37: #{tpu_custom_call.1} parent=5 // pred_check
        %p306 = pneg %p305
      $region38: #{tpu_custom_call.1} parent=5 // pred_check_branch
        %308 = sbr.rel (%p306) target = $region40
      $region39: #{tpu_custom_call.1} parent=5 // pred_region
        %s309 = ssub.s32 %s12, 2
        // Predicated region
        $region41: #{tpu_custom_call.1} parent=39 // pred_check
          %p310 = pneg %p125
        $region42: #{tpu_custom_call.1} parent=39 // pred_check_branch
          %312 = sbr.rel (%p310) target = $region44
        $region43: #{tpu_custom_call.1} parent=39 // pred_region
          %s313 = sand.u32 %s110, 1
          %s314 = scalar_lea.sflag [#allocation3], %s313
          %s315 = sand.u32 %s110, 1
          %s316 = smul.addr %s315, 32
          %s317 = scalar_lea.vmem [#allocation2], %s316
          %319 = dma.done %s314, 512
        $region44: #{tpu_custom_call.1} parent=39 // pred_fallthru
          _
      $region40: #{tpu_custom_call.1} parent=5 // pred_fallthru
        _
    $region6: #{tpu_custom_call.1} parent=1 // loop_footer
      %s16 = sadd.s32 1, %s12
    $region7: #{tpu_custom_call.1} parent=1 // loop_footer_branch
      %11 = sbr.rel target = $region3
    $region8: #{tpu_custom_call.1} parent=1 // loop_exit
      _
    %320 = vsyncpa [#allocation3], 1
    %s321 = scalar_lea.sflag [#allocation3], 1
    %322 = vsyncpa %s321, 1

</llo_original>
